<compile_context>
chip_gen: v7x
topology: tpu7x:2x2x1
jax: 0.10.0
libtpu: 0.0.40
codegen_flags: <defaults>
</compile_context>

<pallas_src>
import functools

import jax
import jax.numpy as jnp
import numpy as np
from jax.experimental import pallas as pl
from jax.experimental.pallas import tpu as pltpu

_LANES = 128


def _sublanes_for(dtype) -> int:
    """Minimum sublane multiple for packed tiles of this dtype."""
    return {4: 8, 2: 16, 1: 32}.get(jnp.dtype(dtype).itemsize, 8)


def _identity_kernel(x_ref, o_ref):
    """Dropout with p == 0.0: straight lane-dense streaming copy."""
    o_ref[...] = x_ref[...]


def _dropout_kernel(x_ref, bits_ref, o_ref, *, threshold: int, scale: float):
    """One (block_rows, 128) tile of dropout for p > 0.

    Keep when bits >= threshold (threshold = round(p * 2^32); the keep
    probability differs from 1-p by at most 2^-32, which is negligible).
    Kept values are scaled by 1/(1-p), dropped values are zeroed.
    """
    keep = bits_ref[...] >= jnp.uint32(threshold)
    x_f32 = x_ref[...].astype(jnp.float32)
    o_ref[...] = jnp.where(keep, x_f32 * jnp.float32(scale), 0.0).astype(o_ref.dtype)


def dropout(x: jax.Array, *, p: float = 0.0, key=None,
            force_kernel: bool = False, block_rows: int = 4096) -> jax.Array:
    """Model2.forward(x): dropout with probability p (default 0.0 = identity)."""
    p = float(p)
    if p < 0.0 or p > 1.0:
        raise ValueError(f"dropout probability must be in [0, 1], got {p}")

    if p == 0.0 and not force_kernel:
        # nn.Dropout(p=0.0) is an exact identity: no kernel launch needed.
        return x
    if p >= 1.0:
        # Everything dropped (matches torch semantics for p=1.0).
        return jnp.zeros_like(x)

    n = int(x.size)
    if n == 0:
        return x

    sub = _sublanes_for(x.dtype)
    rows = pl.cdiv(n, _LANES)
    padded = rows * _LANES
    ragged = padded != n

    if ragged:
        # Only pad the sub-128 tail (unavoidable copy for ragged sizes; the
        # module's actual input here is 14 elements, so this is trivial).
        x2d = jnp.pad(jnp.ravel(x), (0, padded - n)).reshape(rows, _LANES)
    else:
        # Free bitcast: no pad, no slice.
        x2d = x.reshape(rows, _LANES)

    if int(block_rows) >= rows:
        block_rows = rows                      # single full-extent block
    else:
        block_rows = max(sub, (int(block_rows) // sub) * sub)
    grid = (pl.cdiv(rows, block_rows),)

    itemsize = jnp.dtype(x.dtype).itemsize
    compiler_params = pltpu.CompilerParams(
        dimension_semantics=("parallel",),
        vmem_limit_bytes=32 * 1024 * 1024,
    )
    block = pl.BlockSpec((block_rows, _LANES), lambda i: (i, 0))

    if p == 0.0:
        out2d = pl.pallas_call(
            _identity_kernel,
            out_shape=jax.ShapeDtypeStruct((rows, _LANES), x.dtype),
            grid=grid,
            in_specs=[block],
            out_specs=block,
            compiler_params=compiler_params,
            cost_estimate=pl.CostEstimate(
                flops=0, transcendentals=0,
                bytes_accessed=2 * padded * itemsize),
        )(x2d)
    else:
        if key is None:
            key = jax.random.PRNGKey(0)
        # Portable keep-bits (works on TPU and in interpret mode).
        bits = jax.random.bits(key, (rows, _LANES), dtype=jnp.uint32)
        threshold = min(int(round(p * (2.0 ** 32))), 2 ** 32 - 1)
        scale = 1.0 / (1.0 - p)
        out2d = pl.pallas_call(
            functools.partial(_dropout_kernel, threshold=threshold, scale=scale),
            out_shape=jax.ShapeDtypeStruct((rows, _LANES), x.dtype),
            grid=grid,
            in_specs=[block, block],
            out_specs=block,
            compiler_params=compiler_params,
            cost_estimate=pl.CostEstimate(
                flops=2 * padded, transcendentals=0,
                bytes_accessed=(2 * itemsize + 4) * padded),
        )(x2d, bits)

    if ragged:
        return out2d.reshape(-1)[:n].reshape(x.shape)
    return out2d.reshape(x.shape)


def model2_forward(x: jax.Array, *, p: float = 0.0, key=None) -> jax.Array:
    """Equivalent of Model2(p).forward(x)."""
    return dropout(x, p=p, key=key)


if __name__ == "__main__":
    # --- exact constant from the PyTorch script (cast to f32, TPU default) ---
    a10 = np.array([[2.0, 2.0, 2.0, 2.0, 2.0, 2.0, 2.0],
                    [3.0, 3.0, 3.0, 3.0, 3.0, 3.0, 3.0]])
    x_const = jnp.asarray(a10, dtype=jnp.float32)

    # Model2() default (p=0.0): identity.  Force it through the Pallas kernel
    # once to exercise the tiled streaming-copy path.
    out_kernel = jax.block_until_ready(dropout(x_const, p=0.0, force_kernel=True))
    assert out_kernel.shape == x_const.shape and out_kernel.dtype == x_const.dtype
    assert np.array_equal(np.asarray(out_kernel), np.asarray(x_const))

    # Fast path (no kernel launch) also matches.
    out_fast = jax.block_until_ready(model2_forward(x_const))
    assert np.array_equal(np.asarray(out_fast), np.asarray(x_const))

    # Lane-aligned identity (pure reshape, no pad/slice copies).
    key = jax.random.PRNGKey(0)
    x_big = jax.random.normal(key, (16, 128), dtype=jnp.float32)
    out_big = jax.block_until_ready(dropout(x_big, p=0.0, force_kernel=True))
    assert np.array_equal(np.asarray(out_big), np.asarray(x_big))

    # General p > 0 path: mask + scale applied in-kernel.
    p = 0.5
    out_drop = jax.block_until_ready(dropout(x_big, p=p, key=jax.random.PRNGKey(1234)))
    out_np = np.asarray(out_drop)
    x_np = np.asarray(x_big)
    kept = out_np != 0.0
    assert np.allclose(out_np[kept], x_np[kept] / (1.0 - p), rtol=1e-6, atol=1e-6)
    frac_kept = float(kept.mean())
    assert 0.35 < frac_kept < 0.65, f"unexpected keep fraction {frac_kept}"

    print("KERNEL_OK")
</pallas_src>

<mosaic_0001>
module attributes {stable_mosaic.version = 11 : i64} {
  func.func @_identity_kernel(%arg0: i32, %arg1: memref<1x128xf32, #tpu.memory_space<vmem>>, %arg2: memref<1x128xf32, #tpu.memory_space<vmem>>) attributes {dimension_semantics = [#tpu.dimension_semantics<parallel>], iteration_bounds = array<i64: 1>, scalar_prefetch = 0 : i64, scratch_operands = 0 : i64, tpu.core_type = #tpu.core_type<tc>, window_params = [{transform_indices = @transform_0, window_bounds = array<i64: 1, 128>}, {transform_indices = @transform_1, window_bounds = array<i64: 1, 128>}]} {
    %c0 = arith.constant 0 : index
    %c0_0 = arith.constant 0 : index
    %0 = vector.load %arg1[%c0, %c0_0] : memref<1x128xf32, #tpu.memory_space<vmem>>, vector<1x128xf32>
    %c0_1 = arith.constant 0 : index
    %c0_2 = arith.constant 0 : index
    %1 = vector.load %arg2[%c0_1, %c0_2] : memref<1x128xf32, #tpu.memory_space<vmem>>, vector<1x128xf32>
    tpu.vector_store %arg2[%c0_1, %c0_2], %0 {strides = array<i32>} : memref<1x128xf32, #tpu.memory_space<vmem>>, vector<1x128xf32>,
    return
  }
  func.func @transform_0(%arg0: i32) -> (i32, i32) {
    %c0_i32 = arith.constant 0 : i32
    %c0_i32_0 = arith.constant 0 : i32
    return %arg0, %c0_i32 : i32, i32
  }
  func.func @transform_1(%arg0: i32) -> (i32, i32) {
    %c0_i32 = arith.constant 0 : i32
    %c0_i32_0 = arith.constant 0 : i32
    return %arg0, %c0_i32 : i32, i32
  }
}

</mosaic_0001>

<llo_original>
// kernel: tpu_custom_call.1
$region0: #{tpu_custom_call.1}
  #allocation0 [shape = 'u32[]', space=smem, size = 0x4, offset = 0x4, fixed_abs, tag = 'smem constant byte address 0x4 - core index']
  #allocation1 [shape = 'u32[144,128]{1,0:T(1,128)}', space=vmem, size = 0x12000, scoped, tag = 'internal scratch']
  %s0 = inlined_call_operand.hbm [shape: f32[1,128], index: 0, kind: input, shape index: {}]
  %s1 = inlined_call_operand.hbm [shape: f32[1,128], index: 1, kind: output, shape index: {}]
  %s2 = sld [smem:[#allocation0]]
  $region18: #{tpu_custom_call.1} parent=0
    _
  %s4 = ssub.s32 1, %s2
  %s5 = scalar_select 0, %s4, %s2
  $region1: #{tpu_custom_call.1} parent=0
    #allocation2 [shape = 'u8[512]{0}', space=vmem, size = 0x400, scoped, tag = 'input window, operand 0, single buffered']
    #allocation3 [shape = 's32[1]{0}', space=sflag, size = 0x4, scoped, tag = 'scoped memory for tpu_custom_call.1']
    #allocation4 [shape = 's32[1]{0}', space=sflag, size = 0x4, scoped, tag = 'scoped memory for tpu_custom_call.1']
    #allocation5 [shape = 'u8[512]{0}', space=vmem, size = 0x400, scoped, tag = 'output window, operand 0, single buffered']
    %6 = vsyncpa [#allocation3], 0
    %7 = vsyncpa [#allocation4], 0
    // Predicated region
    $region2: #{tpu_custom_call.1} parent=1 // pred_check
      _
    $region3: #{tpu_custom_call.1} parent=1 // pred_check_branch
      %9 = sbr.rel (0) target = $region5
    $region4: #{tpu_custom_call.1} parent=1 // pred_region
      %s11 = ssub.s32 16, 16
      %12 = vsyncadd [#allocation3], %s11
      %s14 = sshll.u32 [#allocation2], 4
      %s15 = int_to_ptr.vmem [resolvable:$true] %s14
      %17 = dma.hbm_to_vmem [thread:$0]  %s0, 16, %s15, [#allocation3]
    $region5: #{tpu_custom_call.1} parent=1 // pred_fallthru
      _
    // Predicated region
    $region6: #{tpu_custom_call.1} parent=1 // pred_check
      _
    $region7: #{tpu_custom_call.1} parent=1 // pred_check_branch
      %19 = sbr.rel (0) target = $region9
    $region8: #{tpu_custom_call.1} parent=1 // pred_region
      %20 = dma.done [#allocation3], 16
    $region9: #{tpu_custom_call.1} parent=1 // pred_fallthru
      _
    %v21 = vld [vmem:[#allocation2] sm:$0x1]
    %22 = vst [vmem:[#allocation5] sm:$0x1] %v21
    // Predicated region
    $region10: #{tpu_custom_call.1} parent=1 // pred_check
      _
    $region11: #{tpu_custom_call.1} parent=1 // pred_check_branch
      %24 = sbr.rel (0) target = $region13
    $region12: #{tpu_custom_call.1} parent=1 // pred_region
      %s26 = ssub.s32 16, 16
      %27 = vsyncadd [#allocation4], %s26
      %s29 = sshll.u32 [#allocation5], 4
      %s30 = int_to_ptr.vmem [resolvable:$true] %s29
      %32 = dma.vmem_to_hbm [thread:$0]  %s30, 16, %s1, [#allocation4]
    $region13: #{tpu_custom_call.1} parent=1 // pred_fallthru
      _
    // Predicated region
    $region14: #{tpu_custom_call.1} parent=1 // pred_check
      _
    $region15: #{tpu_custom_call.1} parent=1 // pred_check_branch
      %34 = sbr.rel (0) target = $region17
    $region16: #{tpu_custom_call.1} parent=1 // pred_region
      %35 = dma.done [#allocation4], 16
    $region17: #{tpu_custom_call.1} parent=1 // pred_fallthru
      _
    %36 = vsyncpa [#allocation3], 1
    %37 = vsyncpa [#allocation4], 1

</llo_original>
